<compile_context>
chip_gen: v6e
topology: v6e:2x2x1
jax: 0.10.0
libtpu: 0.0.40
codegen_flags: <defaults>
</compile_context>

<pallas_src>
import functools

import jax
import jax.numpy as jnp
from jax import lax
from jax.experimental import pallas as pl
from jax.experimental.pallas import tpu as pltpu


_CHECK_EVERY = 500   # torch: residual checked only when iteration % 500 == 0
_UNROLL = 4          # inner-sweep unroll factor (LLO scheduling visibility)


def _sor_kernel(f_ref, u_out_ref, u_scratch, *, omega, dx, tol, max_iter):
    N = f_ref.shape[0]
    f = f_ref[...]

    # ---------- hoisted constants (computed once, outside the hot loop) -----
    row = lax.broadcasted_iota(jnp.int32, (N, N), 0)
    col = lax.broadcasted_iota(jnp.int32, (N, N), 1)
    interior = (row > 0) & (row < N - 1) & (col > 0) & (col < N - 1)

    one_m_omega = jnp.float32(1.0 - omega)
    omega_q = jnp.float32(omega * 0.25)
    # pre-scaled RHS: (omega/4) * dx^2 * f, folded out of the per-sweep math
    b = jnp.float32(omega * 0.25 * dx * dx) * f
    tol2 = jnp.float32(tol * tol)

    use_mxu = N >= 128
    if use_mxu:
        # Tridiagonal shift matrix (ones on sub/super diagonals): the 4-point
        # stencil becomes T @ u + u @ T on the otherwise-idle MXU.
        T = ((row - col == 1) | (col - row == 1)).astype(jnp.float32)

    def neighbor_sum(u):
        if use_mxu:
            return (jnp.dot(T, u, preferred_element_type=jnp.float32)
                    + jnp.dot(u, T, preferred_element_type=jnp.float32))
        # roll wrap-around only lands on boundary rows/cols, which are masked
        # below, so interior points see exactly u[i±1, j] / u[i, j±1].
        return (jnp.roll(u, 1, axis=0) + jnp.roll(u, -1, axis=0)
                + jnp.roll(u, 1, axis=1) + jnp.roll(u, -1, axis=1))

    def sweep(u):
        upd = one_m_omega * u + omega_q * neighbor_sum(u) - b
        return jnp.where(interior, upd, u)

    def run_plain_sweeps(u, count):
        """`count` (static int) sweeps, u carried in vregs, unrolled by _UNROLL."""
        trips, rem = divmod(count, _UNROLL)
        if trips > 0:
            def body(_i, v):
                for _ in range(_UNROLL):
                    v = sweep(v)
                return v
            u = lax.fori_loop(0, trips, body, u)
        for _ in range(rem):
            u = sweep(u)
        return u

    def run_chunk(u, n_plain):
        """One residual-checked sweep + `n_plain` plain sweeps.

        Returns (u_next, converged).  On convergence the *pre-step* u is kept,
        matching torch's break-before-assign semantics.
        """
        u_new = sweep(u)
        diff = u_new - u
        converged = jnp.sum(diff * diff) < tol2       # once per 500 sweeps
        u_rest = run_plain_sweeps(u_new, n_plain)
        return jnp.where(converged, u, u_rest), converged

    # u starts as zeros (torch.zeros((N, N)))
    u_scratch[...] = jnp.zeros_like(u_scratch)

    num_full_chunks = max_iter // _CHECK_EVERY
    tail_iters = max_iter % _CHECK_EVERY

    done = jnp.int32(0)
    if num_full_chunks > 0:
        def cond(carry):
            c, d = carry
            return jnp.logical_and(c < num_full_chunks, d == 0)

        def body(carry):
            c, _ = carry
            # scratch read/write only once per 500-sweep chunk
            u_next, converged = run_chunk(u_scratch[...], _CHECK_EVERY - 1)
            u_scratch[...] = u_next
            return c + 1, jnp.where(converged, jnp.int32(1), jnp.int32(0))

        _, done = lax.while_loop(cond, body, (jnp.int32(0), jnp.int32(0)))

    if tail_iters > 0:
        # trailing partial chunk when max_iter is not a multiple of 500
        @pl.when(done == 0)
        def _():
            u_next, _ = run_chunk(u_scratch[...], tail_iters - 1)
            u_scratch[...] = u_next

    # TODO(synk): the per-500-iteration host-side print of the residual (and
    # the "Converged in N iterations" message) has no clean Pallas equivalent
    # and is omitted (numerical results are unaffected).

    # zero the boundary (u[0,:]=u[-1,:]=u[:,0]=u[:,-1]=0) and write the result
    u_out_ref[...] = jnp.where(interior, u_scratch[...], jnp.float32(0.0))


def poisson_forward(f, *, L, omega=0.5, tol=1e-5, max_iter=10000):
    """Forward pass of PoissonEquation: solve Laplacian(u) = f with SOR."""
    N = f.shape[0]
    assert f.shape == (N, N)
    dx = L / (N - 1)
    kernel = functools.partial(
        _sor_kernel,
        omega=float(omega),
        dx=float(dx),
        tol=float(tol),
        max_iter=int(max_iter),
    )
    # Resident VMEM ≈ (2+2+1) * N*N*4 B (double-buffered in/out + scratch).
    # v7x has only 64 MiB physical VMEM -> single-block N must stay ≲ ~1500;
    # v5e/v6e (128 MiB) stretch further.  Set the scoped limit explicitly.
    vmem_limit = min(64 * 1024 * 1024,
                     max(8 * 1024 * 1024, 8 * N * N * 4 + (1 << 20)))
    return pl.pallas_call(
        kernel,
        out_shape=jax.ShapeDtypeStruct((N, N), jnp.float32),
        in_specs=[pl.BlockSpec((N, N), lambda: (0, 0))],
        out_specs=pl.BlockSpec((N, N), lambda: (0, 0)),
        scratch_shapes=[pltpu.VMEM((N, N), jnp.float32)],
        compiler_params=pltpu.CompilerParams(vmem_limit_bytes=vmem_limit),
    )(f.astype(jnp.float32))


if __name__ == "__main__":
    # Module constructor parameters (small, consistent with the forward).
    L = 1.0
    N = 16
    num_gaussians = 2
    omega = 0.5
    tol = 1e-5
    max_iter = 2000  # module default is 10000; kept small for the demo

    # Parameters created deterministically for module fidelity.
    # (alpha and diffusion_map are not used by the forward computation.)
    alpha = jnp.ones((4 * num_gaussians,), dtype=jnp.float32)
    diffusion_map = jnp.ones((N, N), dtype=jnp.float32)

    key = jax.random.PRNGKey(0)
    f = jax.random.normal(key, (N, N), dtype=jnp.float32)

    u = poisson_forward(f, L=L, omega=omega, tol=tol, max_iter=max_iter)
    u = jax.block_until_ready(u)

    assert u.shape == (N, N) and u.dtype == jnp.float32
    assert bool(jnp.all(jnp.isfinite(u)))
    # boundary must be exactly zero
    assert bool(jnp.all(u[0, :] == 0.0)) and bool(jnp.all(u[-1, :] == 0.0))
    assert bool(jnp.all(u[:, 0] == 0.0)) and bool(jnp.all(u[:, -1] == 0.0))

    print("KERNEL_OK")
</pallas_src>

<mosaic_0001>
module attributes {stable_mosaic.version = 11 : i64} {
  func.func @_sor_kernel(%arg0: memref<16x16xf32, #tpu.memory_space<vmem>>, %arg1: memref<16x16xf32, #tpu.memory_space<vmem>>, %arg2: memref<16x16xf32, #tpu.memory_space<vmem>>) attributes {dimension_semantics = [], scalar_prefetch = 0 : i64, scratch_operands = 1 : i64, tpu.core_type = #tpu.core_type<tc>} {
    %c0 = arith.constant 0 : index
    %c0_0 = arith.constant 0 : index
    %0 = vector.load %arg0[%c0, %c0_0] : memref<16x16xf32, #tpu.memory_space<vmem>>, vector<16x16xf32>
    %1 = tpu.iota {dimensions = array<i32: 0>} : vector<16x16xi32>
    %2 = tpu.iota {dimensions = array<i32: 1>} : vector<16x16xi32>
    %c0_i32 = arith.constant 0 : i32
    %3 = vector.broadcast %c0_i32 : i32 to vector<16x16xi32>
    %4 = arith.cmpi sgt, %1, %3 : vector<16x16xi32>
    %c15_i32 = arith.constant 15 : i32
    %5 = vector.broadcast %c15_i32 : i32 to vector<16x16xi32>
    %6 = arith.cmpi slt, %1, %5 : vector<16x16xi32>
    %7 = arith.andi %4, %6 : vector<16x16xi1>
    %c0_i32_1 = arith.constant 0 : i32
    %8 = vector.broadcast %c0_i32_1 : i32 to vector<16x16xi32>
    %9 = arith.cmpi sgt, %2, %8 : vector<16x16xi32>
    %10 = arith.andi %7, %9 : vector<16x16xi1>
    %c15_i32_2 = arith.constant 15 : i32
    %11 = vector.broadcast %c15_i32_2 : i32 to vector<16x16xi32>
    %12 = arith.cmpi slt, %2, %11 : vector<16x16xi32>
    %13 = arith.andi %10, %12 : vector<16x16xi1>
    %cst = arith.constant 5.55555569E-4 : f32
    %14 = vector.broadcast %cst : f32 to vector<16x16xf32>
    %15 = arith.mulf %14, %0 : vector<16x16xf32>
    %cst_3 = arith.constant 0.000000e+00 : f32
    %16 = vector.broadcast %cst_3 : f32 to vector<16x16xf32>
    %c0_4 = arith.constant 0 : index
    %c0_5 = arith.constant 0 : index
    %17 = vector.load %arg2[%c0_4, %c0_5] : memref<16x16xf32, #tpu.memory_space<vmem>>, vector<16x16xf32>
    tpu.vector_store %arg2[%c0_4, %c0_5], %16 {strides = array<i32>} : memref<16x16xf32, #tpu.memory_space<vmem>>, vector<16x16xf32>,
    %cst_6 = arith.constant 5.000000e-01 : f32
    %cst_7 = arith.constant 1.250000e-01 : f32
    %cst_8 = arith.constant 1.000000e-10 : f32
    %c0_i32_9 = arith.constant 0 : i32
    %c0_i32_10 = arith.constant 0 : i32
    %18:2 = scf.while (%arg3 = %c0_i32_9, %arg4 = %c0_i32_10) : (i32, i32) -> (i32, i32) {
      %c4_i32 = arith.constant 4 : i32
      %23 = arith.cmpi slt, %arg3, %c4_i32 : i32
      %c0_i32_16 = arith.constant 0 : i32
      %24 = arith.cmpi eq, %arg4, %c0_i32_16 : i32
      %25 = arith.andi %23, %24 : i1
      scf.condition(%25) %arg3, %arg4 : i32, i32
    } do {
    ^bb0(%arg3: i32, %arg4: i32):
      %c0_16 = arith.constant 0 : index
      %c0_17 = arith.constant 0 : index
      %23 = vector.load %arg2[%c0_16, %c0_17] : memref<16x16xf32, #tpu.memory_space<vmem>>, vector<16x16xf32>
      %24 = vector.broadcast %cst_6 : f32 to vector<16x16xf32>
      %25 = arith.mulf %24, %23 : vector<16x16xf32>
      %26 = vector.extract_strided_slice %23 {offsets = [15, 0], sizes = [1, 16], strides = [1, 1]} : vector<16x16xf32> to vector<1x16xf32>
      %27 = vector.extract_strided_slice %23 {offsets = [0, 0], sizes = [15, 16], strides = [1, 1]} : vector<16x16xf32> to vector<15x16xf32>
      %28 = tpu.concatenate %26, %27 in 0 : vector<1x16xf32>, vector<15x16xf32> -> vector<16x16xf32>
      %29 = vector.extract_strided_slice %23 {offsets = [1, 0], sizes = [15, 16], strides = [1, 1]} : vector<16x16xf32> to vector<15x16xf32>
      %30 = vector.extract_strided_slice %23 {offsets = [0, 0], sizes = [1, 16], strides = [1, 1]} : vector<16x16xf32> to vector<1x16xf32>
      %31 = tpu.concatenate %29, %30 in 0 : vector<15x16xf32>, vector<1x16xf32> -> vector<16x16xf32>
      %32 = arith.addf %28, %31 : vector<16x16xf32>
      %33 = vector.extract_strided_slice %23 {offsets = [0, 15], sizes = [16, 1], strides = [1, 1]} : vector<16x16xf32> to vector<16x1xf32>
      %34 = vector.extract_strided_slice %23 {offsets = [0, 0], sizes = [16, 15], strides = [1, 1]} : vector<16x16xf32> to vector<16x15xf32>
      %35 = tpu.concatenate %33, %34 in 1 : vector<16x1xf32>, vector<16x15xf32> -> vector<16x16xf32>
      %36 = arith.addf %32, %35 : vector<16x16xf32>
      %37 = vector.extract_strided_slice %23 {offsets = [0, 1], sizes = [16, 15], strides = [1, 1]} : vector<16x16xf32> to vector<16x15xf32>
      %38 = vector.extract_strided_slice %23 {offsets = [0, 0], sizes = [16, 1], strides = [1, 1]} : vector<16x16xf32> to vector<16x1xf32>
      %39 = tpu.concatenate %37, %38 in 1 : vector<16x15xf32>, vector<16x1xf32> -> vector<16x16xf32>
      %40 = arith.addf %36, %39 : vector<16x16xf32>
      %41 = vector.broadcast %cst_7 : f32 to vector<16x16xf32>
      %42 = arith.mulf %41, %40 : vector<16x16xf32>
      %43 = arith.addf %25, %42 : vector<16x16xf32>
      %44 = arith.subf %43, %15 : vector<16x16xf32>
      %45 = arith.select %13, %44, %23 : vector<16x16xi1>, vector<16x16xf32>
      %46 = arith.subf %45, %23 : vector<16x16xf32>
      %47 = arith.mulf %46, %46 : vector<16x16xf32>
      %48 = vector.shape_cast %47 : vector<16x16xf32> to vector<1x16x16xf32>
      %cst_18 = arith.constant dense<0.000000e+00> : vector<1xf32>
      %49 = vector.multi_reduction <add>, %48, %cst_18 [1, 2] : vector<1x16x16xf32> to vector<1xf32>
      %50 = vector.shape_cast %49 : vector<1xf32> to vector<1x1x1xf32>
      %51 = vector.extract %50[0, 0, 0] : f32 from vector<1x1x1xf32>
      %52 = arith.cmpf olt, %51, %cst_8 : f32
      %c0_i32_19 = arith.constant 0 : i32
      %c124_i32 = arith.constant 124 : i32
      %53 = arith.addi %c0_i32_19, %c124_i32 : i32
      %c1_i32 = arith.constant 1 : i32
      %54 = scf.for %arg5 = %c0_i32_19 to %53 step %c1_i32 iter_args(%arg6 = %45) -> (vector<16x16xf32>)  : i32 {
        %125 = vector.broadcast %cst_6 : f32 to vector<16x16xf32>
        %126 = arith.mulf %125, %arg6 : vector<16x16xf32>
        %127 = vector.extract_strided_slice %arg6 {offsets = [15, 0], sizes = [1, 16], strides = [1, 1]} : vector<16x16xf32> to vector<1x16xf32>
        %128 = vector.extract_strided_slice %arg6 {offsets = [0, 0], sizes = [15, 16], strides = [1, 1]} : vector<16x16xf32> to vector<15x16xf32>
        %129 = tpu.concatenate %127, %128 in 0 : vector<1x16xf32>, vector<15x16xf32> -> vector<16x16xf32>
        %130 = vector.extract_strided_slice %arg6 {offsets = [1, 0], sizes = [15, 16], strides = [1, 1]} : vector<16x16xf32> to vector<15x16xf32>
        %131 = vector.extract_strided_slice %arg6 {offsets = [0, 0], sizes = [1, 16], strides = [1, 1]} : vector<16x16xf32> to vector<1x16xf32>
        %132 = tpu.concatenate %130, %131 in 0 : vector<15x16xf32>, vector<1x16xf32> -> vector<16x16xf32>
        %133 = arith.addf %129, %132 : vector<16x16xf32>
        %134 = vector.extract_strided_slice %arg6 {offsets = [0, 15], sizes = [16, 1], strides = [1, 1]} : vector<16x16xf32> to vector<16x1xf32>
        %135 = vector.extract_strided_slice %arg6 {offsets = [0, 0], sizes = [16, 15], strides = [1, 1]} : vector<16x16xf32> to vector<16x15xf32>
        %136 = tpu.concatenate %134, %135 in 1 : vector<16x1xf32>, vector<16x15xf32> -> vector<16x16xf32>
        %137 = arith.addf %133, %136 : vector<16x16xf32>
        %138 = vector.extract_strided_slice %arg6 {offsets = [0, 1], sizes = [16, 15], strides = [1, 1]} : vector<16x16xf32> to vector<16x15xf32>
        %139 = vector.extract_strided_slice %arg6 {offsets = [0, 0], sizes = [16, 1], strides = [1, 1]} : vector<16x16xf32> to vector<16x1xf32>
        %140 = tpu.concatenate %138, %139 in 1 : vector<16x15xf32>, vector<16x1xf32> -> vector<16x16xf32>
        %141 = arith.addf %137, %140 : vector<16x16xf32>
        %142 = vector.broadcast %cst_7 : f32 to vector<16x16xf32>
        %143 = arith.mulf %142, %141 : vector<16x16xf32>
        %144 = arith.addf %126, %143 : vector<16x16xf32>
        %145 = arith.subf %144, %15 : vector<16x16xf32>
        %146 = arith.select %13, %145, %arg6 : vector<16x16xi1>, vector<16x16xf32>
        %147 = vector.broadcast %cst_6 : f32 to vector<16x16xf32>
        %148 = arith.mulf %147, %146 : vector<16x16xf32>
        %149 = vector.extract_strided_slice %146 {offsets = [15, 0], sizes = [1, 16], strides = [1, 1]} : vector<16x16xf32> to vector<1x16xf32>
        %150 = vector.extract_strided_slice %146 {offsets = [0, 0], sizes = [15, 16], strides = [1, 1]} : vector<16x16xf32> to vector<15x16xf32>
        %151 = tpu.concatenate %149, %150 in 0 : vector<1x16xf32>, vector<15x16xf32> -> vector<16x16xf32>
        %152 = vector.extract_strided_slice %146 {offsets = [1, 0], sizes = [15, 16], strides = [1, 1]} : vector<16x16xf32> to vector<15x16xf32>
        %153 = vector.extract_strided_slice %146 {offsets = [0, 0], sizes = [1, 16], strides = [1, 1]} : vector<16x16xf32> to vector<1x16xf32>
        %154 = tpu.concatenate %152, %153 in 0 : vector<15x16xf32>, vector<1x16xf32> -> vector<16x16xf32>
        %155 = arith.addf %151, %154 : vector<16x16xf32>
        %156 = vector.extract_strided_slice %146 {offsets = [0, 15], sizes = [16, 1], strides = [1, 1]} : vector<16x16xf32> to vector<16x1xf32>
        %157 = vector.extract_strided_slice %146 {offsets = [0, 0], sizes = [16, 15], strides = [1, 1]} : vector<16x16xf32> to vector<16x15xf32>
        %158 = tpu.concatenate %156, %157 in 1 : vector<16x1xf32>, vector<16x15xf32> -> vector<16x16xf32>
        %159 = arith.addf %155, %158 : vector<16x16xf32>
        %160 = vector.extract_strided_slice %146 {offsets = [0, 1], sizes = [16, 15], strides = [1, 1]} : vector<16x16xf32> to vector<16x15xf32>
        %161 = vector.extract_strided_slice %146 {offsets = [0, 0], sizes = [16, 1], strides = [1, 1]} : vector<16x16xf32> to vector<16x1xf32>
        %162 = tpu.concatenate %160, %161 in 1 : vector<16x15xf32>, vector<16x1xf32> -> vector<16x16xf32>
        %163 = arith.addf %159, %162 : vector<16x16xf32>
        %164 = vector.broadcast %cst_7 : f32 to vector<16x16xf32>
        %165 = arith.mulf %164, %163 : vector<16x16xf32>
        %166 = arith.addf %148, %165 : vector<16x16xf32>
        %167 = arith.subf %166, %15 : vector<16x16xf32>
        %168 = arith.select %13, %167, %146 : vector<16x16xi1>, vector<16x16xf32>
        %169 = vector.broadcast %cst_6 : f32 to vector<16x16xf32>
        %170 = arith.mulf %169, %168 : vector<16x16xf32>
        %171 = vector.extract_strided_slice %168 {offsets = [15, 0], sizes = [1, 16], strides = [1, 1]} : vector<16x16xf32> to vector<1x16xf32>
        %172 = vector.extract_strided_slice %168 {offsets = [0, 0], sizes = [15, 16], strides = [1, 1]} : vector<16x16xf32> to vector<15x16xf32>
        %173 = tpu.concatenate %171, %172 in 0 : vector<1x16xf32>, vector<15x16xf32> -> vector<16x16xf32>
        %174 = vector.extract_strided_slice %168 {offsets = [1, 0], sizes = [15, 16], strides = [1, 1]} : vector<16x16xf32> to vector<15x16xf32>
        %175 = vector.extract_strided_slice %168 {offsets = [0, 0], sizes = [1, 16], strides = [1, 1]} : vector<16x16xf32> to vector<1x16xf32>
        %176 = tpu.concatenate %174, %175 in 0 : vector<15x16xf32>, vector<1x16xf32> -> vector<16x16xf32>
        %177 = arith.addf %173, %176 : vector<16x16xf32>
        %178 = vector.extract_strided_slice %168 {offsets = [0, 15], sizes = [16, 1], strides = [1, 1]} : vector<16x16xf32> to vector<16x1xf32>
        %179 = vector.extract_strided_slice %168 {offsets = [0, 0], sizes = [16, 15], strides = [1, 1]} : vector<16x16xf32> to vector<16x15xf32>
        %180 = tpu.concatenate %178, %179 in 1 : vector<16x1xf32>, vector<16x15xf32> -> vector<16x16xf32>
        %181 = arith.addf %177, %180 : vector<16x16xf32>
        %182 = vector.extract_strided_slice %168 {offsets = [0, 1], sizes = [16, 15], strides = [1, 1]} : vector<16x16xf32> to vector<16x15xf32>
        %183 = vector.extract_strided_slice %168 {offsets = [0, 0], sizes = [16, 1], strides = [1, 1]} : vector<16x16xf32> to vector<16x1xf32>
        %184 = tpu.concatenate %182, %183 in 1 : vector<16x15xf32>, vector<16x1xf32> -> vector<16x16xf32>
        %185 = arith.addf %181, %184 : vector<16x16xf32>
        %186 = vector.broadcast %cst_7 : f32 to vector<16x16xf32>
        %187 = arith.mulf %186, %185 : vector<16x16xf32>
        %188 = arith.addf %170, %187 : vector<16x16xf32>
        %189 = arith.subf %188, %15 : vector<16x16xf32>
        %190 = arith.select %13, %189, %168 : vector<16x16xi1>, vector<16x16xf32>
        %191 = vector.broadcast %cst_6 : f32 to vector<16x16xf32>
        %192 = arith.mulf %191, %190 : vector<16x16xf32>
        %193 = vector.extract_strided_slice %190 {offsets = [15, 0], sizes = [1, 16], strides = [1, 1]} : vector<16x16xf32> to vector<1x16xf32>
        %194 = vector.extract_strided_slice %190 {offsets = [0, 0], sizes = [15, 16], strides = [1, 1]} : vector<16x16xf32> to vector<15x16xf32>
        %195 = tpu.concatenate %193, %194 in 0 : vector<1x16xf32>, vector<15x16xf32> -> vector<16x16xf32>
        %196 = vector.extract_strided_slice %190 {offsets = [1, 0], sizes = [15, 16], strides = [1, 1]} : vector<16x16xf32> to vector<15x16xf32>
        %197 = vector.extract_strided_slice %190 {offsets = [0, 0], sizes = [1, 16], strides = [1, 1]} : vector<16x16xf32> to vector<1x16xf32>
        %198 = tpu.concatenate %196, %197 in 0 : vector<15x16xf32>, vector<1x16xf32> -> vector<16x16xf32>
        %199 = arith.addf %195, %198 : vector<16x16xf32>
        %200 = vector.extract_strided_slice %190 {offsets = [0, 15], sizes = [16, 1], strides = [1, 1]} : vector<16x16xf32> to vector<16x1xf32>
        %201 = vector.extract_strided_slice %190 {offsets = [0, 0], sizes = [16, 15], strides = [1, 1]} : vector<16x16xf32> to vector<16x15xf32>
        %202 = tpu.concatenate %200, %201 in 1 : vector<16x1xf32>, vector<16x15xf32> -> vector<16x16xf32>
        %203 = arith.addf %199, %202 : vector<16x16xf32>
        %204 = vector.extract_strided_slice %190 {offsets = [0, 1], sizes = [16, 15], strides = [1, 1]} : vector<16x16xf32> to vector<16x15xf32>
        %205 = vector.extract_strided_slice %190 {offsets = [0, 0], sizes = [16, 1], strides = [1, 1]} : vector<16x16xf32> to vector<16x1xf32>
        %206 = tpu.concatenate %204, %205 in 1 : vector<16x15xf32>, vector<16x1xf32> -> vector<16x16xf32>
        %207 = arith.addf %203, %206 : vector<16x16xf32>
        %208 = vector.broadcast %cst_7 : f32 to vector<16x16xf32>
        %209 = arith.mulf %208, %207 : vector<16x16xf32>
        %210 = arith.addf %192, %209 : vector<16x16xf32>
        %211 = arith.subf %210, %15 : vector<16x16xf32>
        %212 = arith.select %13, %211, %190 : vector<16x16xi1>, vector<16x16xf32>
        scf.yield %212 : vector<16x16xf32>
      }
      %c124_i32_20 = arith.constant 124 : i32
      %55 = vector.broadcast %cst_6 : f32 to vector<16x16xf32>
      %56 = arith.mulf %55, %54 : vector<16x16xf32>
      %57 = vector.extract_strided_slice %54 {offsets = [15, 0], sizes = [1, 16], strides = [1, 1]} : vector<16x16xf32> to vector<1x16xf32>
      %58 = vector.extract_strided_slice %54 {offsets = [0, 0], sizes = [15, 16], strides = [1, 1]} : vector<16x16xf32> to vector<15x16xf32>
      %59 = tpu.concatenate %57, %58 in 0 : vector<1x16xf32>, vector<15x16xf32> -> vector<16x16xf32>
      %60 = vector.extract_strided_slice %54 {offsets = [1, 0], sizes = [15, 16], strides = [1, 1]} : vector<16x16xf32> to vector<15x16xf32>
      %61 = vector.extract_strided_slice %54 {offsets = [0, 0], sizes = [1, 16], strides = [1, 1]} : vector<16x16xf32> to vector<1x16xf32>
      %62 = tpu.concatenate %60, %61 in 0 : vector<15x16xf32>, vector<1x16xf32> -> vector<16x16xf32>
      %63 = arith.addf %59, %62 : vector<16x16xf32>
      %64 = vector.extract_strided_slice %54 {offsets = [0, 15], sizes = [16, 1], strides = [1, 1]} : vector<16x16xf32> to vector<16x1xf32>
      %65 = vector.extract_strided_slice %54 {offsets = [0, 0], sizes = [16, 15], strides = [1, 1]} : vector<16x16xf32> to vector<16x15xf32>
      %66 = tpu.concatenate %64, %65 in 1 : vector<16x1xf32>, vector<16x15xf32> -> vector<16x16xf32>
      %67 = arith.addf %63, %66 : vector<16x16xf32>
      %68 = vector.extract_strided_slice %54 {offsets = [0, 1], sizes = [16, 15], strides = [1, 1]} : vector<16x16xf32> to vector<16x15xf32>
      %69 = vector.extract_strided_slice %54 {offsets = [0, 0], sizes = [16, 1], strides = [1, 1]} : vector<16x16xf32> to vector<16x1xf32>
      %70 = tpu.concatenate %68, %69 in 1 : vector<16x15xf32>, vector<16x1xf32> -> vector<16x16xf32>
      %71 = arith.addf %67, %70 : vector<16x16xf32>
      %72 = vector.broadcast %cst_7 : f32 to vector<16x16xf32>
      %73 = arith.mulf %72, %71 : vector<16x16xf32>
      %74 = arith.addf %56, %73 : vector<16x16xf32>
      %75 = arith.subf %74, %15 : vector<16x16xf32>
      %76 = arith.select %13, %75, %54 : vector<16x16xi1>, vector<16x16xf32>
      %77 = vector.broadcast %cst_6 : f32 to vector<16x16xf32>
      %78 = arith.mulf %77, %76 : vector<16x16xf32>
      %79 = vector.extract_strided_slice %76 {offsets = [15, 0], sizes = [1, 16], strides = [1, 1]} : vector<16x16xf32> to vector<1x16xf32>
      %80 = vector.extract_strided_slice %76 {offsets = [0, 0], sizes = [15, 16], strides = [1, 1]} : vector<16x16xf32> to vector<15x16xf32>
      %81 = tpu.concatenate %79, %80 in 0 : vector<1x16xf32>, vector<15x16xf32> -> vector<16x16xf32>
      %82 = vector.extract_strided_slice %76 {offsets = [1, 0], sizes = [15, 16], strides = [1, 1]} : vector<16x16xf32> to vector<15x16xf32>
      %83 = vector.extract_strided_slice %76 {offsets = [0, 0], sizes = [1, 16], strides = [1, 1]} : vector<16x16xf32> to vector<1x16xf32>
      %84 = tpu.concatenate %82, %83 in 0 : vector<15x16xf32>, vector<1x16xf32> -> vector<16x16xf32>
      %85 = arith.addf %81, %84 : vector<16x16xf32>
      %86 = vector.extract_strided_slice %76 {offsets = [0, 15], sizes = [16, 1], strides = [1, 1]} : vector<16x16xf32> to vector<16x1xf32>
      %87 = vector.extract_strided_slice %76 {offsets = [0, 0], sizes = [16, 15], strides = [1, 1]} : vector<16x16xf32> to vector<16x15xf32>
      %88 = tpu.concatenate %86, %87 in 1 : vector<16x1xf32>, vector<16x15xf32> -> vector<16x16xf32>
      %89 = arith.addf %85, %88 : vector<16x16xf32>
      %90 = vector.extract_strided_slice %76 {offsets = [0, 1], sizes = [16, 15], strides = [1, 1]} : vector<16x16xf32> to vector<16x15xf32>
      %91 = vector.extract_strided_slice %76 {offsets = [0, 0], sizes = [16, 1], strides = [1, 1]} : vector<16x16xf32> to vector<16x1xf32>
      %92 = tpu.concatenate %90, %91 in 1 : vector<16x15xf32>, vector<16x1xf32> -> vector<16x16xf32>
      %93 = arith.addf %89, %92 : vector<16x16xf32>
      %94 = vector.broadcast %cst_7 : f32 to vector<16x16xf32>
      %95 = arith.mulf %94, %93 : vector<16x16xf32>
      %96 = arith.addf %78, %95 : vector<16x16xf32>
      %97 = arith.subf %96, %15 : vector<16x16xf32>
      %98 = arith.select %13, %97, %76 : vector<16x16xi1>, vector<16x16xf32>
      %99 = vector.broadcast %cst_6 : f32 to vector<16x16xf32>
      %100 = arith.mulf %99, %98 : vector<16x16xf32>
      %101 = vector.extract_strided_slice %98 {offsets = [15, 0], sizes = [1, 16], strides = [1, 1]} : vector<16x16xf32> to vector<1x16xf32>
      %102 = vector.extract_strided_slice %98 {offsets = [0, 0], sizes = [15, 16], strides = [1, 1]} : vector<16x16xf32> to vector<15x16xf32>
      %103 = tpu.concatenate %101, %102 in 0 : vector<1x16xf32>, vector<15x16xf32> -> vector<16x16xf32>
      %104 = vector.extract_strided_slice %98 {offsets = [1, 0], sizes = [15, 16], strides = [1, 1]} : vector<16x16xf32> to vector<15x16xf32>
      %105 = vector.extract_strided_slice %98 {offsets = [0, 0], sizes = [1, 16], strides = [1, 1]} : vector<16x16xf32> to vector<1x16xf32>
      %106 = tpu.concatenate %104, %105 in 0 : vector<15x16xf32>, vector<1x16xf32> -> vector<16x16xf32>
      %107 = arith.addf %103, %106 : vector<16x16xf32>
      %108 = vector.extract_strided_slice %98 {offsets = [0, 15], sizes = [16, 1], strides = [1, 1]} : vector<16x16xf32> to vector<16x1xf32>
      %109 = vector.extract_strided_slice %98 {offsets = [0, 0], sizes = [16, 15], strides = [1, 1]} : vector<16x16xf32> to vector<16x15xf32>
      %110 = tpu.concatenate %108, %109 in 1 : vector<16x1xf32>, vector<16x15xf32> -> vector<16x16xf32>
      %111 = arith.addf %107, %110 : vector<16x16xf32>
      %112 = vector.extract_strided_slice %98 {offsets = [0, 1], sizes = [16, 15], strides = [1, 1]} : vector<16x16xf32> to vector<16x15xf32>
      %113 = vector.extract_strided_slice %98 {offsets = [0, 0], sizes = [16, 1], strides = [1, 1]} : vector<16x16xf32> to vector<16x1xf32>
      %114 = tpu.concatenate %112, %113 in 1 : vector<16x15xf32>, vector<16x1xf32> -> vector<16x16xf32>
      %115 = arith.addf %111, %114 : vector<16x16xf32>
      %116 = vector.broadcast %cst_7 : f32 to vector<16x16xf32>
      %117 = arith.mulf %116, %115 : vector<16x16xf32>
      %118 = arith.addf %100, %117 : vector<16x16xf32>
      %119 = arith.subf %118, %15 : vector<16x16xf32>
      %120 = arith.select %13, %119, %98 : vector<16x16xi1>, vector<16x16xf32>
      %121 = arith.select %52, %23, %120 : vector<16x16xf32>
      %c0_21 = arith.constant 0 : index
      %c0_22 = arith.constant 0 : index
      %122 = vector.load %arg2[%c0_21, %c0_22] : memref<16x16xf32, #tpu.memory_space<vmem>>, vector<16x16xf32>
      tpu.vector_store %arg2[%c0_21, %c0_22], %121 {strides = array<i32>} : memref<16x16xf32, #tpu.memory_space<vmem>>, vector<16x16xf32>,
      %c1_i32_23 = arith.constant 1 : i32
      %123 = arith.addi %arg3, %c1_i32_23 : i32
      %c1_i32_24 = arith.constant 1 : i32
      %c0_i32_25 = arith.constant 0 : i32
      %124 = arith.select %52, %c1_i32_24, %c0_i32_25 : i32
      scf.yield %123, %124 : i32, i32
    }
    %c0_11 = arith.constant 0 : index
    %c0_12 = arith.constant 0 : index
    %19 = vector.load %arg2[%c0_11, %c0_12] : memref<16x16xf32, #tpu.memory_space<vmem>>, vector<16x16xf32>
    %cst_13 = arith.constant 0.000000e+00 : f32
    %20 = vector.broadcast %cst_13 : f32 to vector<16x16xf32>
    %21 = arith.select %13, %19, %20 : vector<16x16xi1>, vector<16x16xf32>
    %c0_14 = arith.constant 0 : index
    %c0_15 = arith.constant 0 : index
    %22 = vector.load %arg1[%c0_14, %c0_15] : memref<16x16xf32, #tpu.memory_space<vmem>>, vector<16x16xf32>
    tpu.vector_store %arg1[%c0_14, %c0_15], %21 {strides = array<i32>} : memref<16x16xf32, #tpu.memory_space<vmem>>, vector<16x16xf32>,
    return
  }
}

</mosaic_0001>

<llo_original>
// kernel: tpu_custom_call.1
$region0: #{tpu_custom_call.1}
  #allocation0 [shape = 'u32[]', space=smem, size = 0x4, offset = 0x4, fixed_abs, tag = 'smem constant byte address 0x4 - core index']
  #allocation1 [shape = 'u32[144,128]{1,0:T(1,128)}', space=vmem, size = 0x12000, scoped, tag = 'internal scratch']
  #allocation2 [shape = 'f32[16,16]{1,0:T(8,128)}', space=vmem, size = 0x2000, scoped, tag = 'scratch operand']
  %s0 = inlined_call_operand.hbm [shape: f32[16,16], index: 0, kind: input, shape index: {}]
  %s1 = inlined_call_operand.hbm [shape: f32[16,16], index: 1, kind: output, shape index: {}]
  %s2 = sld [smem:[#allocation0]]
  $region32: #{tpu_custom_call.1} parent=0
    _
  %s4 = ssub.s32 1, %s2
  %s5 = scalar_select 0, %s4, %s2
  $region1: #{tpu_custom_call.1} parent=0
    #allocation3 [shape = 'u8[8192]{0}', space=vmem, size = 0x2000, scoped, tag = 'input window, operand 0, single buffered']
    #allocation4 [shape = 's32[1]{0}', space=sflag, size = 0x4, scoped, tag = 'scoped memory for tpu_custom_call.1']
    #allocation5 [shape = 's32[1]{0}', space=sflag, size = 0x4, scoped, tag = 'scoped memory for tpu_custom_call.1']
    #allocation6 [shape = 'u8[8192]{0}', space=vmem, size = 0x2000, scoped, tag = 'output window, operand 0, single buffered']
    %6 = vsyncpa [#allocation4], 0
    %7 = vsyncpa [#allocation5], 0
    // Predicated region
    $region2: #{tpu_custom_call.1} parent=1 // pred_check
      _
    $region3: #{tpu_custom_call.1} parent=1 // pred_check_branch
      %9 = sbr.rel (0) target = $region5
    $region4: #{tpu_custom_call.1} parent=1 // pred_region
      %s11 = ssub.s32 256, 256
      %12 = vsyncadd [#allocation4], %s11
      %s13 = sshll.u32 [#allocation3], 4
      %s14 = int_to_ptr.vmem [resolvable:$true] %s13
      %19 = dma.hbm_to_vmem [thread:$0]  %s0, 256, %s14, [#allocation4], 128, 128, 8
    $region5: #{tpu_custom_call.1} parent=1 // pred_fallthru
      _
    // Predicated region
    $region6: #{tpu_custom_call.1} parent=1 // pred_check
      _
    $region7: #{tpu_custom_call.1} parent=1 // pred_check_branch
      %21 = sbr.rel (0) target = $region9
    $region8: #{tpu_custom_call.1} parent=1 // pred_region
      %22 = dma.done [#allocation4], 256
    $region9: #{tpu_custom_call.1} parent=1 // pred_fallthru
      _
    %v23 = vld [vmem:[#allocation3] sm:$0xff]
    %v24 = vld [vmem:[#allocation3 + $0x8] sm:$0xff]
    %v25 = vlaneseq
    %v26 = vshrl.u32 %v25, 7
    %v27 = vadd.s32 %v26, 8
    %v28 = vlaneseq
    %v29 = vand.u32 %v28, 127
    %vm30 = vcmp.gt.s32.totalorder %v26, 0
    %vm31 = vcmp.gt.s32.totalorder %v27, 0
    %vm32 = vcmp.lt.s32.totalorder %v26, 15
    %vm33 = vcmp.lt.s32.totalorder %v27, 15
    %vm34 = vmand %vm30, %vm32
    %vm35 = vmand %vm31, %vm33
    %vm36 = vcmp.gt.s32.totalorder %v29, 0
    %vm37 = vmand %vm34, %vm36
    %vm38 = vmand %vm35, %vm36
    %vm39 = vcmp.lt.s32.totalorder %v29, 15
    %vm40 = vmand %vm37, %vm39
    %vm41 = vmand %vm38, %vm39
    %v42 = vmul.f32 %v23, 0.00055555557
    %v43 = vmul.f32 %v24, 0.00055555557
    %vm44 = vcmask 130048
    %45 = vst.msk [vmem:[#allocation2] sm:$0xff] %vm44, 0.0
    %46 = vst.msk [vmem:[#allocation2 + $0x8] sm:$0xff] %vm44, 0.0
    // While loop
    $region10: #{tpu_custom_call.1} parent=1 // loop_pre_header
      _
    $region11: #{tpu_custom_call.1} parent=1 // loop_header
      %s48 = sphi 0, %s574
      %s49 = sphi 0, %s567
      %p50 = scmp.lt.s32.totalorder %s48, 4
      %p51 = scmp.eq.s32.totalorder %s49, 0
      %p52 = pnand %p50, %p51
      %p53 = pneg %p52
    $region12: #{tpu_custom_call.1} parent=1 // loop_header_branch
      %55 = sbr.rel (%p52) target = $region16
    $region13: #{tpu_custom_call.1} parent=1 // loop_body
      %v56 = vld [vmem:[#allocation2] sm:$0xff]
      %v57 = vld [vmem:[#allocation2 + $0x8] sm:$0xff]
      %v58 = vmul.f32 %v56, 0.5
      %v59 = vmul.f32 %v57, 0.5
      %v61 = vrot.slane %v57, 7
      %vm64 = vcmask 1040384
      %v65 = vrot.slane %v56, 7
      %v66 = vsel %vm64, %v65, %v61
      %v69 = vsel %vm64, %v61, %v65
      %vm70 = vcmask 1046528
      %v71 = vrot.slane %v56, 1
      %v72 = vrot.slane %v57, 1
      %v73 = vsel %vm70, %v71, %v72
      %v77 = vsel %vm70, %v72, %v71
      %v78 = vadd.f32 %v69, %v73
      %v79 = vadd.f32 %v66, %v77
      %80 = vrot.lane.b32.xlu0 %v56, 113
      %v81 = vpop.permute.xlu0 %80
      %82 = vrot.lane.b32.xlu0 %v57, 113
      %v83 = vpop.permute.xlu0 %82
      %86 = vrot.lane.b32.xlu0 %v56, 1
      %v87 = vpop.permute.xlu0 %86
      %88 = vrot.lane.b32.xlu0 %v57, 1
      %v89 = vpop.permute.xlu0 %88
      %vm92 = vcmask 7168
      %v93 = vsel %vm92, %v81, %v87
      %v94 = vsel %vm92, %v83, %v89
      %v95 = vadd.f32 %v78, %v93
      %v96 = vadd.f32 %v79, %v94
      %97 = vrot.lane.b32.xlu0 %v56, 127
      %v98 = vpop.permute.xlu0 %97
      %99 = vrot.lane.b32.xlu0 %v57, 127
      %v100 = vpop.permute.xlu0 %99
      %103 = vrot.lane.b32.xlu0 %v56, 15
      %v104 = vpop.permute.xlu0 %103
      %105 = vrot.lane.b32.xlu0 %v57, 15
      %v106 = vpop.permute.xlu0 %105
      %vm109 = vcmask 121856
      %v110 = vsel %vm109, %v98, %v104
      %v111 = vsel %vm109, %v100, %v106
      %v112 = vadd.f32 %v95, %v110
      %v113 = vadd.f32 %v96, %v111
      %v114 = vmul.f32 %v112, 0.125
      %v115 = vmul.f32 %v113, 0.125
      %v116 = vadd.f32 %v58, %v114
      %v117 = vadd.f32 %v59, %v115
      %v118 = vsub.f32 %v116, %v42
      %v119 = vsub.f32 %v117, %v43
      %v120 = vsel %vm40, %v118, %v56
      %v121 = vsel %vm41, %v119, %v57
      %v122 = vsub.f32 %v120, %v56
      %v123 = vsub.f32 %v121, %v57
      %v124 = vmul.f32 %v122, %v122
      %v125 = vmul.f32 %v123, %v123
      %v126 = vsel %vm44, %v124, 0.0
      %v127 = vsel %vm44, %v125, 0.0
      %v128 = vadd.f32 %v126, %v127
      %129 = vadd.xlane.f32.xlu0 %v128
      %v130 = vpop.xlane.xlu0 %129
      %v131 = vrot.slane %v130, 4
      %v132 = vadd.f32 %v130, %v131
      %v133 = vrot.slane %v132, 2
      %v134 = vadd.f32 %v132, %v133
      %v135 = vrot.slane %v134, 1
      %v136 = vadd.f32 %v134, %v135
      %s137 = vtos %v136
      %p138 = scmp.lt.f32.partialorder %s137, 1e-10
      loop: start=0, step=1, limit=124
      $region17: #{tpu_custom_call.1} parent=13 // loop_pre_header
        _
      $region18: #{tpu_custom_call.1} parent=13 // loop_header
        %s140 = sphi 0, %s144
        %p141 = scmp.ge.s32.totalorder %s140, 124
        %v145 = vphi %v120, %v385
        %v146 = vphi %v121, %v386
      $region19: #{tpu_custom_call.1} parent=13 // loop_header_branch
        %143 = sbr.rel (%p141) target = $region23
      $region20: #{tpu_custom_call.1} parent=13 // loop_body
        %v147 = vmul.f32 %v145, 0.5
        %v148 = vmul.f32 %v146, 0.5
        %v150 = vrot.slane %v146, 7
        %v153 = vrot.slane %v145, 7
        %v154 = vsel %vm64, %v153, %v150
        %v157 = vsel %vm64, %v150, %v153
        %v158 = vrot.slane %v145, 1
        %v159 = vrot.slane %v146, 1
        %v160 = vsel %vm70, %v158, %v159
        %v164 = vsel %vm70, %v159, %v158
        %v165 = vadd.f32 %v157, %v160
        %v166 = vadd.f32 %v154, %v164
        %167 = vrot.lane.b32.xlu0 %v145, 113
        %v168 = vpop.permute.xlu0 %167
        %169 = vrot.lane.b32.xlu0 %v146, 113
        %v170 = vpop.permute.xlu0 %169
        %173 = vrot.lane.b32.xlu0 %v145, 1
        %v174 = vpop.permute.xlu0 %173
        %175 = vrot.lane.b32.xlu0 %v146, 1
        %v176 = vpop.permute.xlu0 %175
        %v179 = vsel %vm92, %v168, %v174
        %v180 = vsel %vm92, %v170, %v176
        %v181 = vadd.f32 %v165, %v179
        %v182 = vadd.f32 %v166, %v180
        %183 = vrot.lane.b32.xlu0 %v145, 127
        %v184 = vpop.permute.xlu0 %183
        %185 = vrot.lane.b32.xlu0 %v146, 127
        %v186 = vpop.permute.xlu0 %185
        %189 = vrot.lane.b32.xlu0 %v145, 15
        %v190 = vpop.permute.xlu0 %189
        %191 = vrot.lane.b32.xlu0 %v146, 15
        %v192 = vpop.permute.xlu0 %191
        %v195 = vsel %vm109, %v184, %v190
        %v196 = vsel %vm109, %v186, %v192
        %v197 = vadd.f32 %v181, %v195
        %v198 = vadd.f32 %v182, %v196
        %v199 = vmul.f32 %v197, 0.125
        %v200 = vmul.f32 %v198, 0.125
        %v201 = vadd.f32 %v147, %v199
        %v202 = vadd.f32 %v148, %v200
        %v203 = vsub.f32 %v201, %v42
        %v204 = vsub.f32 %v202, %v43
        %v205 = vsel %vm40, %v203, %v145
        %v206 = vsel %vm41, %v204, %v146
        %v207 = vmul.f32 %v205, 0.5
        %v208 = vmul.f32 %v206, 0.5
        %v210 = vrot.slane %v206, 7
        %v213 = vrot.slane %v205, 7
        %v214 = vsel %vm64, %v213, %v210
        %v217 = vsel %vm64, %v210, %v213
        %v218 = vrot.slane %v205, 1
        %v219 = vrot.slane %v206, 1
        %v220 = vsel %vm70, %v218, %v219
        %v224 = vsel %vm70, %v219, %v218
        %v225 = vadd.f32 %v217, %v220
        %v226 = vadd.f32 %v214, %v224
        %227 = vrot.lane.b32.xlu0 %v205, 113
        %v228 = vpop.permute.xlu0 %227
        %229 = vrot.lane.b32.xlu0 %v206, 113
        %v230 = vpop.permute.xlu0 %229
        %233 = vrot.lane.b32.xlu0 %v205, 1
        %v234 = vpop.permute.xlu0 %233
        %235 = vrot.lane.b32.xlu0 %v206, 1
        %v236 = vpop.permute.xlu0 %235
        %v239 = vsel %vm92, %v228, %v234
        %v240 = vsel %vm92, %v230, %v236
        %v241 = vadd.f32 %v225, %v239
        %v242 = vadd.f32 %v226, %v240
        %243 = vrot.lane.b32.xlu0 %v205, 127
        %v244 = vpop.permute.xlu0 %243
        %245 = vrot.lane.b32.xlu0 %v206, 127
        %v246 = vpop.permute.xlu0 %245
        %249 = vrot.lane.b32.xlu0 %v205, 15
        %v250 = vpop.permute.xlu0 %249
        %251 = vrot.lane.b32.xlu0 %v206, 15
        %v252 = vpop.permute.xlu0 %251
        %v255 = vsel %vm109, %v244, %v250
        %v256 = vsel %vm109, %v246, %v252
        %v257 = vadd.f32 %v241, %v255
        %v258 = vadd.f32 %v242, %v256
        %v259 = vmul.f32 %v257, 0.125
        %v260 = vmul.f32 %v258, 0.125
        %v261 = vadd.f32 %v207, %v259
        %v262 = vadd.f32 %v208, %v260
        %v263 = vsub.f32 %v261, %v42
        %v264 = vsub.f32 %v262, %v43
        %v265 = vsel %vm40, %v263, %v145
        %v266 = vsel %vm41, %v264, %v146
        %v267 = vmul.f32 %v265, 0.5
        %v268 = vmul.f32 %v266, 0.5
        %v270 = vrot.slane %v266, 7
        %v273 = vrot.slane %v265, 7
        %v274 = vsel %vm64, %v273, %v270
        %v277 = vsel %vm64, %v270, %v273
        %v278 = vrot.slane %v265, 1
        %v279 = vrot.slane %v266, 1
        %v280 = vsel %vm70, %v278, %v279
        %v284 = vsel %vm70, %v279, %v278
        %v285 = vadd.f32 %v277, %v280
        %v286 = vadd.f32 %v274, %v284
        %287 = vrot.lane.b32.xlu0 %v265, 113
        %v288 = vpop.permute.xlu0 %287
        %289 = vrot.lane.b32.xlu0 %v266, 113
        %v290 = vpop.permute.xlu0 %289
        %293 = vrot.lane.b32.xlu0 %v265, 1
        %v294 = vpop.permute.xlu0 %293
        %295 = vrot.lane.b32.xlu0 %v266, 1
        %v296 = vpop.permute.xlu0 %295
        %v299 = vsel %vm92, %v288, %v294
        %v300 = vsel %vm92, %v290, %v296
        %v301 = vadd.f32 %v285, %v299
        %v302 = vadd.f32 %v286, %v300
        %303 = vrot.lane.b32.xlu0 %v265, 127
        %v304 = vpop.permute.xlu0 %303
        %305 = vrot.lane.b32.xlu0 %v266, 127
        %v306 = vpop.permute.xlu0 %305
        %309 = vrot.lane.b32.xlu0 %v265, 15
        %v310 = vpop.permute.xlu0 %309
        %311 = vrot.lane.b32.xlu0 %v266, 15
        %v312 = vpop.permute.xlu0 %311
        %v315 = vsel %vm109, %v304, %v310
        %v316 = vsel %vm109, %v306, %v312
        %v317 = vadd.f32 %v301, %v315
        %v318 = vadd.f32 %v302, %v316
        %v319 = vmul.f32 %v317, 0.125
        %v320 = vmul.f32 %v318, 0.125
        %v321 = vadd.f32 %v267, %v319
        %v322 = vadd.f32 %v268, %v320
        %v323 = vsub.f32 %v321, %v42
        %v324 = vsub.f32 %v322, %v43
        %v325 = vsel %vm40, %v323, %v145
        %v326 = vsel %vm41, %v324, %v146
        %v327 = vmul.f32 %v325, 0.5
        %v328 = vmul.f32 %v326, 0.5
        %v330 = vrot.slane %v326, 7
        %v333 = vrot.slane %v325, 7
        %v334 = vsel %vm64, %v333, %v330
        %v337 = vsel %vm64, %v330, %v333
        %v338 = vrot.slane %v325, 1
        %v339 = vrot.slane %v326, 1
        %v340 = vsel %vm70, %v338, %v339
        %v344 = vsel %vm70, %v339, %v338
        %v345 = vadd.f32 %v337, %v340
        %v346 = vadd.f32 %v334, %v344
        %347 = vrot.lane.b32.xlu0 %v325, 113
        %v348 = vpop.permute.xlu0 %347
        %349 = vrot.lane.b32.xlu0 %v326, 113
        %v350 = vpop.permute.xlu0 %349
        %353 = vrot.lane.b32.xlu0 %v325, 1
        %v354 = vpop.permute.xlu0 %353
        %355 = vrot.lane.b32.xlu0 %v326, 1
        %v356 = vpop.permute.xlu0 %355
        %v359 = vsel %vm92, %v348, %v354
        %v360 = vsel %vm92, %v350, %v356
        %v361 = vadd.f32 %v345, %v359
        %v362 = vadd.f32 %v346, %v360
        %363 = vrot.lane.b32.xlu0 %v325, 127
        %v364 = vpop.permute.xlu0 %363
        %365 = vrot.lane.b32.xlu0 %v326, 127
        %v366 = vpop.permute.xlu0 %365
        %369 = vrot.lane.b32.xlu0 %v325, 15
        %v370 = vpop.permute.xlu0 %369
        %371 = vrot.lane.b32.xlu0 %v326, 15
        %v372 = vpop.permute.xlu0 %371
        %v375 = vsel %vm109, %v364, %v370
        %v376 = vsel %vm109, %v366, %v372
        %v377 = vadd.f32 %v361, %v375
        %v378 = vadd.f32 %v362, %v376
        %v379 = vmul.f32 %v377, 0.125
        %v380 = vmul.f32 %v378, 0.125
        %v381 = vadd.f32 %v327, %v379
        %v382 = vadd.f32 %v328, %v380
        %v383 = vsub.f32 %v381, %v42
        %v384 = vsub.f32 %v382, %v43
        %v385 = vsel %vm40, %v383, %v145
        %v386 = vsel %vm41, %v384, %v146
      $region21: #{tpu_custom_call.1} parent=13 // loop_footer
        %s144 = sadd.s32 1, %s140
      $region22: #{tpu_custom_call.1} parent=13 // loop_footer_branch
        %139 = sbr.rel target = $region18
      $region23: #{tpu_custom_call.1} parent=13 // loop_exit
        _
      %v387 = vmul.f32 %v145, 0.5
      %v388 = vmul.f32 %v146, 0.5
      %v390 = vrot.slane %v146, 7
      %v393 = vrot.slane %v145, 7
      %v394 = vsel %vm64, %v393, %v390
      %v397 = vsel %vm64, %v390, %v393
      %v398 = vrot.slane %v145, 1
      %v399 = vrot.slane %v146, 1
      %v400 = vsel %vm70, %v398, %v399
      %v404 = vsel %vm70, %v399, %v398
      %v405 = vadd.f32 %v397, %v400
      %v406 = vadd.f32 %v394, %v404
      %407 = vrot.lane.b32.xlu0 %v145, 113
      %v408 = vpop.permute.xlu0 %407
      %409 = vrot.lane.b32.xlu0 %v146, 113
      %v410 = vpop.permute.xlu0 %409
      %413 = vrot.lane.b32.xlu0 %v145, 1
      %v414 = vpop.permute.xlu0 %413
      %415 = vrot.lane.b32.xlu0 %v146, 1
      %v416 = vpop.permute.xlu0 %415
      %v419 = vsel %vm92, %v408, %v414
      %v420 = vsel %vm92, %v410, %v416
      %v421 = vadd.f32 %v405, %v419
      %v422 = vadd.f32 %v406, %v420
      %423 = vrot.lane.b32.xlu0 %v145, 127
      %v424 = vpop.permute.xlu0 %423
      %425 = vrot.lane.b32.xlu0 %v146, 127
      %v426 = vpop.permute.xlu0 %425
      %429 = vrot.lane.b32.xlu0 %v145, 15
      %v430 = vpop.permute.xlu0 %429
      %431 = vrot.lane.b32.xlu0 %v146, 15
      %v432 = vpop.permute.xlu0 %431
      %v435 = vsel %vm109, %v424, %v430
      %v436 = vsel %vm109, %v426, %v432
      %v437 = vadd.f32 %v421, %v435
      %v438 = vadd.f32 %v422, %v436
      %v439 = vmul.f32 %v437, 0.125
      %v440 = vmul.f32 %v438, 0.125
      %v441 = vadd.f32 %v387, %v439
      %v442 = vadd.f32 %v388, %v440
      %v443 = vsub.f32 %v441, %v42
      %v444 = vsub.f32 %v442, %v43
      %v445 = vsel %vm40, %v443, %v145
      %v446 = vsel %vm41, %v444, %v146
      %v447 = vmul.f32 %v445, 0.5
      %v448 = vmul.f32 %v446, 0.5
      %v450 = vrot.slane %v446, 7
      %v453 = vrot.slane %v445, 7
      %v454 = vsel %vm64, %v453, %v450
      %v457 = vsel %vm64, %v450, %v453
      %v458 = vrot.slane %v445, 1
      %v459 = vrot.slane %v446, 1
      %v460 = vsel %vm70, %v458, %v459
      %v464 = vsel %vm70, %v459, %v458
      %v465 = vadd.f32 %v457, %v460
      %v466 = vadd.f32 %v454, %v464
      %467 = vrot.lane.b32.xlu0 %v445, 113
      %v468 = vpop.permute.xlu0 %467
      %469 = vrot.lane.b32.xlu0 %v446, 113
      %v470 = vpop.permute.xlu0 %469
      %473 = vrot.lane.b32.xlu0 %v445, 1
      %v474 = vpop.permute.xlu0 %473
      %475 = vrot.lane.b32.xlu0 %v446, 1
      %v476 = vpop.permute.xlu0 %475
      %v479 = vsel %vm92, %v468, %v474
      %v480 = vsel %vm92, %v470, %v476
      %v481 = vadd.f32 %v465, %v479
      %v482 = vadd.f32 %v466, %v480
      %483 = vrot.lane.b32.xlu0 %v445, 127
      %v484 = vpop.permute.xlu0 %483
      %485 = vrot.lane.b32.xlu0 %v446, 127
      %v486 = vpop.permute.xlu0 %485
      %489 = vrot.lane.b32.xlu0 %v445, 15
      %v490 = vpop.permute.xlu0 %489
      %491 = vrot.lane.b32.xlu0 %v446, 15
      %v492 = vpop.permute.xlu0 %491
      %v495 = vsel %vm109, %v484, %v490
      %v496 = vsel %vm109, %v486, %v492
      %v497 = vadd.f32 %v481, %v495
      %v498 = vadd.f32 %v482, %v496
      %v499 = vmul.f32 %v497, 0.125
      %v500 = vmul.f32 %v498, 0.125
      %v501 = vadd.f32 %v447, %v499
      %v502 = vadd.f32 %v448, %v500
      %v503 = vsub.f32 %v501, %v42
      %v504 = vsub.f32 %v502, %v43
      %v505 = vsel %vm40, %v503, %v145
      %v506 = vsel %vm41, %v504, %v146
      %v507 = vmul.f32 %v505, 0.5
      %v508 = vmul.f32 %v506, 0.5
      %v510 = vrot.slane %v506, 7
      %v513 = vrot.slane %v505, 7
      %v514 = vsel %vm64, %v513, %v510
      %v517 = vsel %vm64, %v510, %v513
      %v518 = vrot.slane %v505, 1
      %v519 = vrot.slane %v506, 1
      %v520 = vsel %vm70, %v518, %v519
      %v524 = vsel %vm70, %v519, %v518
      %v525 = vadd.f32 %v517, %v520
      %v526 = vadd.f32 %v514, %v524
      %527 = vrot.lane.b32.xlu0 %v505, 113
      %v528 = vpop.permute.xlu0 %527
      %529 = vrot.lane.b32.xlu0 %v506, 113
      %v530 = vpop.permute.xlu0 %529
      %533 = vrot.lane.b32.xlu0 %v505, 1
      %v534 = vpop.permute.xlu0 %533
      %535 = vrot.lane.b32.xlu0 %v506, 1
      %v536 = vpop.permute.xlu0 %535
      %v539 = vsel %vm92, %v528, %v534
      %v540 = vsel %vm92, %v530, %v536
      %v541 = vadd.f32 %v525, %v539
      %v542 = vadd.f32 %v526, %v540
      %543 = vrot.lane.b32.xlu0 %v505, 127
      %v544 = vpop.permute.xlu0 %543
      %545 = vrot.lane.b32.xlu0 %v506, 127
      %v546 = vpop.permute.xlu0 %545
      %549 = vrot.lane.b32.xlu0 %v505, 15
      %v550 = vpop.permute.xlu0 %549
      %551 = vrot.lane.b32.xlu0 %v506, 15
      %v552 = vpop.permute.xlu0 %551
      %v555 = vsel %vm109, %v544, %v550
      %v556 = vsel %vm109, %v546, %v552
      %v557 = vadd.f32 %v541, %v555
      %v558 = vadd.f32 %v542, %v556
      %v559 = vmul.f32 %v557, 0.125
      %v560 = vmul.f32 %v558, 0.125
      %v561 = vadd.f32 %v507, %v559
      %v562 = vadd.f32 %v508, %v560
      %v563 = vsub.f32 %v561, %v42
      %v564 = vsub.f32 %v562, %v43
      %v565 = vsel %vm40, %v563, %v145
      %v566 = vsel %vm41, %v564, %v146
      %s567 = scalar_select %p138, 1, 0
      %v568 = vstv %s567
      %vm569 = vcmp.eq.s32.totalorder %v568, 1
      %v570 = vsel %vm569, %v56, %v565
      %v571 = vsel %vm569, %v57, %v566
      %572 = vst.msk [vmem:[#allocation2] sm:$0xff] %vm44, %v570
      %573 = vst.msk [vmem:[#allocation2 + $0x8] sm:$0xff] %vm44, %v571
      %s574 = sadd.s32 %s48, 1
    $region14: #{tpu_custom_call.1} parent=1 // loop_footer
      _
    $region15: #{tpu_custom_call.1} parent=1 // loop_footer_branch
      %47 = sbr.rel target = $region11
    $region16: #{tpu_custom_call.1} parent=1 // loop_exit
      _
    %v575 = vld [vmem:[#allocation2] sm:$0xff]
    %v576 = vld [vmem:[#allocation2 + $0x8] sm:$0xff]
    %v577 = vsel %vm40, %v575, 0.0
    %v578 = vsel %vm41, %v576, 0.0
    %579 = vst.msk [vmem:[#allocation6] sm:$0xff] %vm44, %v577
    %580 = vst.msk [vmem:[#allocation6 + $0x8] sm:$0xff] %vm44, %v578
    // Predicated region
    $region24: #{tpu_custom_call.1} parent=1 // pred_check
      _
    $region25: #{tpu_custom_call.1} parent=1 // pred_check_branch
      %582 = sbr.rel (0) target = $region27
    $region26: #{tpu_custom_call.1} parent=1 // pred_region
      %s584 = ssub.s32 256, 256
      %585 = vsyncadd [#allocation5], %s584
      %s586 = sshll.u32 [#allocation6], 4
      %s587 = int_to_ptr.vmem [resolvable:$true] %s586
      %592 = dma.vmem_to_hbm [thread:$0]  %s587, 256, %s1, [#allocation5], 128, 128, 8
    $region27: #{tpu_custom_call.1} parent=1 // pred_fallthru
      _
    // Predicated region
    $region28: #{tpu_custom_call.1} parent=1 // pred_check
      _
    $region29: #{tpu_custom_call.1} parent=1 // pred_check_branch
      %594 = sbr.rel (0) target = $region31
    $region30: #{tpu_custom_call.1} parent=1 // pred_region
      %595 = dma.done [#allocation5], 256
    $region31: #{tpu_custom_call.1} parent=1 // pred_fallthru
      _
    %596 = vsyncpa [#allocation4], 1
    %597 = vsyncpa [#allocation5], 1

</llo_original>
